<compile_context>
chip_gen: v6e
topology: v6e:2x2x1
jax: 0.10.0
libtpu: 0.0.40
codegen_flags: <defaults>
</compile_context>

<pallas_src>
import re

import numpy as np

import jax
import jax.numpy as jnp
from jax.experimental import pallas as pl
from jax.experimental.pallas import tpu as pltpu


# ---------------------------------------------------------------------------
# Kernel
# ---------------------------------------------------------------------------
def decoder_kernel(x_ref,
                   w0_ref, b0_ref,
                   w1_ref, b1_ref,
                   w2_ref, b2_ref,
                   wo_ref, bo_ref,
                   o_ref):
    """Fused MLP decoder: 3 x (Linear + ReLU) + output Linear, row-packed.

    Weights live in the compute dtype (f32 or bf16); activations are cast to
    that dtype before each MXU dot, accumulation stays f32, bias add + ReLU
    run in f32 on the VPU.  Params: w0,b0, w1,b1, w2,b2, wo,bo.
    """
    cdt = w0_ref.dtype
    x = x_ref[...].astype(cdt)

    h = jnp.dot(x, w0_ref[...], preferred_element_type=jnp.float32) + b0_ref[...]
    h = jnp.maximum(h, 0.0)

    h = jnp.dot(h.astype(cdt), w1_ref[...],
                preferred_element_type=jnp.float32) + b1_ref[...]
    h = jnp.maximum(h, 0.0)

    h = jnp.dot(h.astype(cdt), w2_ref[...],
                preferred_element_type=jnp.float32) + b2_ref[...]
    h = jnp.maximum(h, 0.0)

    y = jnp.dot(h.astype(cdt), wo_ref[...],
                preferred_element_type=jnp.float32) + bo_ref[...]
    o_ref[...] = y.astype(o_ref.dtype)


# ---------------------------------------------------------------------------
# Host-side helpers (run once, not per call)
# ---------------------------------------------------------------------------
def _round_up(a, m):
    return -(-a // m) * m


def _round_down(a, m):
    return (a // m) * m


def _tpu_generation():
    """Best-effort TPU generation (5, 6, 7, ...) or None if unknown."""
    try:
        dev = jax.devices()[0]
        if dev.platform != "tpu":
            return None
        m = re.search(r"(\d+)", dev.device_kind)
        return int(m.group(1)) if m else None
    except Exception:
        return None


def _choose_pack(x_dim, gen):
    """Logical rows folded into one lane-dense packed row."""
    lanes = 256 if (gen is not None and gen >= 6) else 128   # MXU width
    if x_dim <= lanes and lanes % x_dim == 0:
        return lanes // x_dim
    if x_dim <= 128 and 128 % x_dim == 0:
        return 128 // x_dim
    return 1  # fall back to the natural (masked-store) layout


def _block_diag(w, pack, dtype):
    """[fi, fo] -> block-diagonal [pack*fi, pack*fo] (pack independent copies)."""
    w = np.asarray(w, dtype=np.float32)
    fi, fo = w.shape
    out = np.zeros((pack * fi, pack * fo), np.float32)
    for k in range(pack):
        out[k * fi:(k + 1) * fi, k * fo:(k + 1) * fo] = w
    return jnp.asarray(out, dtype=dtype)


def _tile_bias(b, pack):
    """[fo] -> [1, pack*fo] f32, matching the packed (row-folded) layout."""
    b = np.asarray(b, dtype=np.float32)
    return jnp.asarray(np.tile(b, pack).reshape(1, -1), jnp.float32)


def pack_decoder_params(params, pack, compute_dtype=jnp.float32):
    """Precompute block-diagonal weights / tiled biases (do this ONCE)."""
    packed = {}
    for i in range(3):
        packed[f"w{i}"] = _block_diag(params[f"w{i}"], pack, compute_dtype)
        packed[f"b{i}"] = _tile_bias(params[f"b{i}"], pack)
    packed["wo"] = _block_diag(params["wo"], pack, compute_dtype)
    packed["bo"] = _tile_bias(params["bo"], pack)
    return packed


# ---------------------------------------------------------------------------
# Forward (traced under jit; all tiling math is static)
# ---------------------------------------------------------------------------
def _decoder_forward(x, packed, *, pack, block_b, out_dtype, two_core_split):
    B, latent = x.shape
    x_dim = packed["wo"].shape[1] // pack
    hidden = [packed[f"w{i}"].shape[1] // pack for i in range(3)]

    out_bytes = jnp.dtype(out_dtype).itemsize
    # Sublane alignment of the packed row count: 8 for 32-bit, 16 for 16-bit out.
    sub = 8 if out_bytes >= 4 else 16
    align = pack * sub                                  # alignment in logical rows

    # Per-logical-row VMEM: double-buffered input/output streams + f32
    # intermediates.  Cap the tile so the working set stays well under the
    # scoped-VMEM limit on every generation (v7x has only 64 MiB physical).
    per_row = 2 * (latent * 4 + x_dim * out_bytes) + (sum(hidden) + x_dim) * 4
    vmem_budget = 24 << 20
    max_rows = max(align, _round_down(vmem_budget // per_row, align))
    block_b = max(align, _round_down(min(block_b, max_rows), align))

    if two_core_split and B > align:
        # v7x (2 TCs): exactly one block per core when it fits the budget —
        # round UP so we never create a third, mostly-padded block.
        half = _round_up((B + 1) // 2, align)
        block_b = min(block_b, half)
    else:
        # Single TensorCore: one big block if the whole batch fits.
        block_b = min(block_b, _round_up(B, align))

    n_blocks = -(-B // block_b)                         # cdiv
    B_pad = n_blocks * block_b
    if B_pad != B:
        x = jnp.pad(x, ((0, B_pad - B), (0, 0)))

    rows_p = B_pad // pack                              # packed rows
    block_rows = block_b // pack                        # packed rows per tile
    x_p = x.reshape(rows_p, pack * latent)              # row-major -> free

    # Explicit VMEM limit keeps full double-buffering at big tiles (v5e's
    # scoped default is only 16 MiB); stay below v7x's 64 MiB physical.
    vmem_limit = int(min(60 << 20, max(32 << 20, 2 * block_b * per_row)))

    batch_map = lambda i: (i, 0)
    rep_map = lambda i: (0, 0)
    full_spec = lambda a: pl.BlockSpec(a.shape, rep_map)

    out_p = pl.pallas_call(
        decoder_kernel,
        out_shape=jax.ShapeDtypeStruct((rows_p, pack * x_dim), out_dtype),
        grid=(n_blocks,),
        in_specs=[
            pl.BlockSpec((block_rows, pack * latent), batch_map),
            full_spec(packed["w0"]), full_spec(packed["b0"]),
            full_spec(packed["w1"]), full_spec(packed["b1"]),
            full_spec(packed["w2"]), full_spec(packed["b2"]),
            full_spec(packed["wo"]), full_spec(packed["bo"]),
        ],
        out_specs=pl.BlockSpec((block_rows, pack * x_dim), batch_map),
        compiler_params=pltpu.CompilerParams(
            dimension_semantics=("parallel",),
            vmem_limit_bytes=vmem_limit,
        ),
    )(x_p,
      packed["w0"], packed["b0"],
      packed["w1"], packed["b1"],
      packed["w2"], packed["b2"],
      packed["wo"], packed["bo"])

    # Unpack rows (free row-major reshape) and drop any batch padding.
    return out_p.reshape(B_pad, x_dim)[:B]


def make_decoder(params, *, block_b=32768, out_dtype=jnp.float32,
                 compute_dtype=None, pack=None, two_core_split=None):
    """Pack weights once and return a jitted decoder forward fn x -> [B, x_dim]."""
    gen = _tpu_generation()
    x_dim = params["wo"].shape[1]
    if pack is None:
        pack = _choose_pack(x_dim, gen)
    if compute_dtype is None:
        # v7x flips this kernel from HBM-bound to MXU/vreg bound -> bf16 operands.
        compute_dtype = jnp.bfloat16 if (gen is not None and gen >= 7) else jnp.float32
    if two_core_split is None:
        two_core_split = gen is not None and gen >= 7   # 2 TensorCores per chip

    packed = pack_decoder_params(params, pack, compute_dtype)

    @jax.jit
    def fwd(x):
        return _decoder_forward(x, packed, pack=pack, block_b=block_b,
                                out_dtype=out_dtype,
                                two_core_split=two_core_split)

    return fwd


# ---------------------------------------------------------------------------
# Parameter init / pure-JAX reference
# ---------------------------------------------------------------------------
def init_decoder_params(key, x_dim, latent_size, hidden_sizes):
    """Deterministic synthetic parameters matching the PyTorch module shapes.

    hidden_sizes is the reversed config.hidden_sizes (application order:
    latent -> h0 -> h1 -> h2 -> x_dim).  Weights stored as [in, out].
    """
    sizes = [latent_size] + list(hidden_sizes)
    params = {}
    keys = jax.random.split(key, 2 * (len(hidden_sizes) + 1))
    k_idx = 0
    for i in range(len(hidden_sizes)):
        fan_in, fan_out = sizes[i], sizes[i + 1]
        bound = 1.0 / jnp.sqrt(fan_in)
        params[f"w{i}"] = jax.random.uniform(
            keys[k_idx], (fan_in, fan_out), jnp.float32, -bound, bound)
        params[f"b{i}"] = jax.random.uniform(
            keys[k_idx + 1], (fan_out,), jnp.float32, -bound, bound)
        k_idx += 2
    fan_in = sizes[-1]
    bound = 1.0 / jnp.sqrt(fan_in)
    params["wo"] = jax.random.uniform(
        keys[k_idx], (fan_in, x_dim), jnp.float32, -bound, bound)
    params["bo"] = jax.random.uniform(
        keys[k_idx + 1], (x_dim,), jnp.float32, -bound, bound)
    return params


def decoder_reference(x, params):
    """Pure-JAX reference for correctness checking."""
    h = jnp.maximum(x @ params["w0"] + params["b0"], 0.0)
    h = jnp.maximum(h @ params["w1"] + params["b1"], 0.0)
    h = jnp.maximum(h @ params["w2"] + params["b2"], 0.0)
    return h @ params["wo"] + params["bo"]


if __name__ == "__main__":
    # USADConfig defaults: hidden_sizes=(25, 10, 5) -> reversed (5, 10, 25),
    # latent_size=5.  Small x_dim and a modest batch.
    x_dim = 32
    latent_size = 5
    hidden_sizes = (5, 10, 25)   # reversed config.hidden_sizes
    batch = 256

    key = jax.random.PRNGKey(0)
    k_params, k_x = jax.random.split(key)
    params = init_decoder_params(k_params, x_dim, latent_size, hidden_sizes)
    x = jax.random.normal(k_x, (batch, latent_size), jnp.float32)

    ref = decoder_reference(x, params)

    # Full-precision path (default on v5e/v6e): tight tolerance vs reference.
    dec_f32 = make_decoder(params, compute_dtype=jnp.float32,
                           out_dtype=jnp.float32)
    out = jax.block_until_ready(dec_f32(x))
    assert out.shape == (batch, x_dim)
    assert jnp.allclose(out, ref, atol=1e-5, rtol=1e-5), "f32 mismatch vs reference"

    # bf16-compute / bf16-output path (bandwidth optimization): looser tolerance.
    dec_bf16 = make_decoder(params, compute_dtype=jnp.bfloat16,
                            out_dtype=jnp.bfloat16)
    out_bf16 = jax.block_until_ready(dec_bf16(x)).astype(jnp.float32)
    assert out_bf16.shape == (batch, x_dim)
    assert jnp.allclose(out_bf16, ref, atol=5e-2, rtol=5e-2), "bf16 mismatch vs reference"

    print("KERNEL_OK")
</pallas_src>

<mosaic_0001>
module attributes {stable_mosaic.version = 11 : i64} {
  func.func @decoder_kernel(%arg0: i32, %arg1: memref<64x20xf32, #tpu.memory_space<vmem>>, %arg2: memref<20x20xf32, #tpu.memory_space<vmem>>, %arg3: memref<1x20xf32, #tpu.memory_space<vmem>>, %arg4: memref<20x40xf32, #tpu.memory_space<vmem>>, %arg5: memref<1x40xf32, #tpu.memory_space<vmem>>, %arg6: memref<40x100xf32, #tpu.memory_space<vmem>>, %arg7: memref<1x100xf32, #tpu.memory_space<vmem>>, %arg8: memref<100x128xf32, #tpu.memory_space<vmem>>, %arg9: memref<1x128xf32, #tpu.memory_space<vmem>>, %arg10: memref<64x128xf32, #tpu.memory_space<vmem>>) attributes {dimension_semantics = [#tpu.dimension_semantics<parallel>], iteration_bounds = array<i64: 1>, scalar_prefetch = 0 : i64, scratch_operands = 0 : i64, tpu.core_type = #tpu.core_type<tc>, window_params = [{transform_indices = @transform_0, window_bounds = array<i64: 64, 20>}, {pipeline_mode = #tpu.pipeline_mode<synchronous>, transform_indices = @transform_1, window_bounds = array<i64: 20, 20>}, {pipeline_mode = #tpu.pipeline_mode<synchronous>, transform_indices = @transform_2, window_bounds = array<i64: 1, 20>}, {pipeline_mode = #tpu.pipeline_mode<synchronous>, transform_indices = @transform_3, window_bounds = array<i64: 20, 40>}, {pipeline_mode = #tpu.pipeline_mode<synchronous>, transform_indices = @transform_4, window_bounds = array<i64: 1, 40>}, {pipeline_mode = #tpu.pipeline_mode<synchronous>, transform_indices = @transform_5, window_bounds = array<i64: 40, 100>}, {pipeline_mode = #tpu.pipeline_mode<synchronous>, transform_indices = @transform_6, window_bounds = array<i64: 1, 100>}, {pipeline_mode = #tpu.pipeline_mode<synchronous>, transform_indices = @transform_7, window_bounds = array<i64: 100, 128>}, {pipeline_mode = #tpu.pipeline_mode<synchronous>, transform_indices = @transform_8, window_bounds = array<i64: 1, 128>}, {transform_indices = @transform_9, window_bounds = array<i64: 64, 128>}]} {
    %c0 = arith.constant 0 : index
    %c0_0 = arith.constant 0 : index
    %0 = vector.load %arg1[%c0, %c0_0] : memref<64x20xf32, #tpu.memory_space<vmem>>, vector<64x20xf32>
    %c0_1 = arith.constant 0 : index
    %c0_2 = arith.constant 0 : index
    %1 = vector.load %arg2[%c0_1, %c0_2] : memref<20x20xf32, #tpu.memory_space<vmem>>, vector<20x20xf32>
    %cst = arith.constant dense<0.000000e+00> : vector<64x20xf32>
    %2 = tpu.matmul %0, %1, %cst {dimension_numbers = #tpu.dot_dimension_numbers<[1], [0], [0], [1], [0, 0, 1, 1], [], []>} : vector<64x20xf32>, vector<20x20xf32>, vector<64x20xf32> -> vector<64x20xf32>
    %c0_3 = arith.constant 0 : index
    %c0_4 = arith.constant 0 : index
    %3 = vector.load %arg3[%c0_3, %c0_4] : memref<1x20xf32, #tpu.memory_space<vmem>>, vector<1x20xf32>
    %4 = vector.broadcast %3 : vector<1x20xf32> to vector<64x20xf32>
    %5 = arith.addf %2, %4 : vector<64x20xf32>
    %cst_5 = arith.constant 0.000000e+00 : f32
    %6 = vector.broadcast %cst_5 : f32 to vector<64x20xf32>
    %7 = arith.maximumf %5, %6 : vector<64x20xf32>
    %c0_6 = arith.constant 0 : index
    %c0_7 = arith.constant 0 : index
    %8 = vector.load %arg4[%c0_6, %c0_7] : memref<20x40xf32, #tpu.memory_space<vmem>>, vector<20x40xf32>
    %cst_8 = arith.constant dense<0.000000e+00> : vector<64x40xf32>
    %9 = tpu.matmul %7, %8, %cst_8 {dimension_numbers = #tpu.dot_dimension_numbers<[1], [0], [0], [1], [0, 0, 1, 1], [], []>} : vector<64x20xf32>, vector<20x40xf32>, vector<64x40xf32> -> vector<64x40xf32>
    %c0_9 = arith.constant 0 : index
    %c0_10 = arith.constant 0 : index
    %10 = vector.load %arg5[%c0_9, %c0_10] : memref<1x40xf32, #tpu.memory_space<vmem>>, vector<1x40xf32>
    %11 = vector.broadcast %10 : vector<1x40xf32> to vector<64x40xf32>
    %12 = arith.addf %9, %11 : vector<64x40xf32>
    %cst_11 = arith.constant 0.000000e+00 : f32
    %13 = vector.broadcast %cst_11 : f32 to vector<64x40xf32>
    %14 = arith.maximumf %12, %13 : vector<64x40xf32>
    %c0_12 = arith.constant 0 : index
    %c0_13 = arith.constant 0 : index
    %15 = vector.load %arg6[%c0_12, %c0_13] : memref<40x100xf32, #tpu.memory_space<vmem>>, vector<40x100xf32>
    %cst_14 = arith.constant dense<0.000000e+00> : vector<64x100xf32>
    %16 = tpu.matmul %14, %15, %cst_14 {dimension_numbers = #tpu.dot_dimension_numbers<[1], [0], [0], [1], [0, 0, 1, 1], [], []>} : vector<64x40xf32>, vector<40x100xf32>, vector<64x100xf32> -> vector<64x100xf32>
    %c0_15 = arith.constant 0 : index
    %c0_16 = arith.constant 0 : index
    %17 = vector.load %arg7[%c0_15, %c0_16] : memref<1x100xf32, #tpu.memory_space<vmem>>, vector<1x100xf32>
    %18 = vector.broadcast %17 : vector<1x100xf32> to vector<64x100xf32>
    %19 = arith.addf %16, %18 : vector<64x100xf32>
    %cst_17 = arith.constant 0.000000e+00 : f32
    %20 = vector.broadcast %cst_17 : f32 to vector<64x100xf32>
    %21 = arith.maximumf %19, %20 : vector<64x100xf32>
    %c0_18 = arith.constant 0 : index
    %c0_19 = arith.constant 0 : index
    %22 = vector.load %arg8[%c0_18, %c0_19] : memref<100x128xf32, #tpu.memory_space<vmem>>, vector<100x128xf32>
    %cst_20 = arith.constant dense<0.000000e+00> : vector<64x128xf32>
    %23 = tpu.matmul %21, %22, %cst_20 {dimension_numbers = #tpu.dot_dimension_numbers<[1], [0], [0], [1], [0, 0, 1, 1], [], []>} : vector<64x100xf32>, vector<100x128xf32>, vector<64x128xf32> -> vector<64x128xf32>
    %c0_21 = arith.constant 0 : index
    %c0_22 = arith.constant 0 : index
    %24 = vector.load %arg9[%c0_21, %c0_22] : memref<1x128xf32, #tpu.memory_space<vmem>>, vector<1x128xf32>
    %25 = vector.broadcast %24 : vector<1x128xf32> to vector<64x128xf32>
    %26 = arith.addf %23, %25 : vector<64x128xf32>
    %c0_23 = arith.constant 0 : index
    %c0_24 = arith.constant 0 : index
    %27 = vector.load %arg10[%c0_23, %c0_24] : memref<64x128xf32, #tpu.memory_space<vmem>>, vector<64x128xf32>
    tpu.vector_store %arg10[%c0_23, %c0_24], %26 {strides = array<i32>} : memref<64x128xf32, #tpu.memory_space<vmem>>, vector<64x128xf32>,
    return
  }
  func.func @transform_0(%arg0: i32) -> (i32, i32) {
    %c0_i32 = arith.constant 0 : i32
    %c0_i32_0 = arith.constant 0 : i32
    return %arg0, %c0_i32 : i32, i32
  }
  func.func @transform_1(%arg0: i32) -> (i32, i32) {
    %c0_i32 = arith.constant 0 : i32
    %c0_i32_0 = arith.constant 0 : i32
    %c0_i32_1 = arith.constant 0 : i32
    return %c0_i32, %c0_i32_0 : i32, i32
  }
  func.func @transform_2(%arg0: i32) -> (i32, i32) {
    %c0_i32 = arith.constant 0 : i32
    %c0_i32_0 = arith.constant 0 : i32
    %c0_i32_1 = arith.constant 0 : i32
    return %c0_i32, %c0_i32_0 : i32, i32
  }
  func.func @transform_3(%arg0: i32) -> (i32, i32) {
    %c0_i32 = arith.constant 0 : i32
    %c0_i32_0 = arith.constant 0 : i32
    %c0_i32_1 = arith.constant 0 : i32
    return %c0_i32, %c0_i32_0 : i32, i32
  }
  func.func @transform_4(%arg0: i32) -> (i32, i32) {
    %c0_i32 = arith.constant 0 : i32
    %c0_i32_0 = arith.constant 0 : i32
    %c0_i32_1 = arith.constant 0 : i32
    return %c0_i32, %c0_i32_0 : i32, i32
  }
  func.func @transform_5(%arg0: i32) -> (i32, i32) {
    %c0_i32 = arith.constant 0 : i32
    %c0_i32_0 = arith.constant 0 : i32
    %c0_i32_1 = arith.constant 0 : i32
    return %c0_i32, %c0_i32_0 : i32, i32
  }
  func.func @transform_6(%arg0: i32) -> (i32, i32) {
    %c0_i32 = arith.constant 0 : i32
    %c0_i32_0 = arith.constant 0 : i32
    %c0_i32_1 = arith.constant 0 : i32
    return %c0_i32, %c0_i32_0 : i32, i32
  }
  func.func @transform_7(%arg0: i32) -> (i32, i32) {
    %c0_i32 = arith.constant 0 : i32
    %c0_i32_0 = arith.constant 0 : i32
    %c0_i32_1 = arith.constant 0 : i32
    return %c0_i32, %c0_i32_0 : i32, i32
  }
  func.func @transform_8(%arg0: i32) -> (i32, i32) {
    %c0_i32 = arith.constant 0 : i32
    %c0_i32_0 = arith.constant 0 : i32
    %c0_i32_1 = arith.constant 0 : i32
    return %c0_i32, %c0_i32_0 : i32, i32
  }
  func.func @transform_9(%arg0: i32) -> (i32, i32) {
    %c0_i32 = arith.constant 0 : i32
    %c0_i32_0 = arith.constant 0 : i32
    return %arg0, %c0_i32 : i32, i32
  }
}

</mosaic_0001>

<llo_original>
// kernel: fwd.1
$region0: #{fwd.1}
  #allocation0 [shape = 'u32[]', space=smem, size = 0x4, offset = 0x4, fixed_abs, tag = 'smem constant byte address 0x4 - core index']
  #allocation1 [shape = 'u32[144,128]{1,0:T(1,128)}', space=vmem, size = 0x12000, scoped, tag = 'internal scratch']
  %s0 = inlined_call_operand.vmem [shape: f32[64,20], index: 0, kind: input, shape index: {}]
  %s1 = inlined_call_operand.vmem [shape: f32[20,20], index: 1, kind: input, shape index: {}]
  %s2 = inlined_call_operand.vmem [shape: f32[1,20], index: 2, kind: input, shape index: {}]
  %s3 = inlined_call_operand.vmem [shape: f32[20,40], index: 3, kind: input, shape index: {}]
  %s4 = inlined_call_operand.vmem [shape: f32[1,40], index: 4, kind: input, shape index: {}]
  %s5 = inlined_call_operand.vmem [shape: f32[40,100], index: 5, kind: input, shape index: {}]
  %s6 = inlined_call_operand.vmem [shape: f32[1,100], index: 6, kind: input, shape index: {}]
  %s7 = inlined_call_operand.vmem [shape: f32[100,128], index: 7, kind: input, shape index: {}]
  %s8 = inlined_call_operand.vmem [shape: f32[1,128], index: 8, kind: input, shape index: {}]
  %s9 = inlined_call_operand.vmem [shape: f32[64,128], index: 9, kind: output, shape index: {}]
  %s10 = sld [smem:[#allocation0]]
  $region46: #{fwd.1} parent=0
    _
  %s12 = ssub.s32 1, %s10
  %s13 = scalar_select 0, %s12, %s10
  // Predicated region
  $region2: #{fwd.1} parent=0 // pred_check
    _
  $region3: #{fwd.1} parent=0 // pred_check_branch
    %15 = sbr.rel (0) target = $region5
  $region4: #{fwd.1} parent=0 // pred_region
    _
  $region5: #{fwd.1} parent=0 // pred_fallthru
    _
  // Predicated region
  $region6: #{fwd.1} parent=0 // pred_check
    _
  $region7: #{fwd.1} parent=0 // pred_check_branch
    %17 = sbr.rel (0) target = $region9
  $region8: #{fwd.1} parent=0 // pred_region
    _
  $region9: #{fwd.1} parent=0 // pred_fallthru
    _
  // Predicated region
  $region10: #{fwd.1} parent=0 // pred_check
    _
  $region11: #{fwd.1} parent=0 // pred_check_branch
    %19 = sbr.rel (0) target = $region13
  $region12: #{fwd.1} parent=0 // pred_region
    _
  $region13: #{fwd.1} parent=0 // pred_fallthru
    _
  // Predicated region
  $region14: #{fwd.1} parent=0 // pred_check
    _
  $region15: #{fwd.1} parent=0 // pred_check_branch
    %21 = sbr.rel (0) target = $region17
  $region16: #{fwd.1} parent=0 // pred_region
    _
  $region17: #{fwd.1} parent=0 // pred_fallthru
    _
  // Predicated region
  $region18: #{fwd.1} parent=0 // pred_check
    _
  $region19: #{fwd.1} parent=0 // pred_check_branch
    %23 = sbr.rel (0) target = $region21
  $region20: #{fwd.1} parent=0 // pred_region
    _
  $region21: #{fwd.1} parent=0 // pred_fallthru
    _
  // Predicated region
  $region22: #{fwd.1} parent=0 // pred_check
    _
  $region23: #{fwd.1} parent=0 // pred_check_branch
    %25 = sbr.rel (0) target = $region25
  $region24: #{fwd.1} parent=0 // pred_region
    _
  $region25: #{fwd.1} parent=0 // pred_fallthru
    _
  // Predicated region
  $region26: #{fwd.1} parent=0 // pred_check
    _
  $region27: #{fwd.1} parent=0 // pred_check_branch
    %27 = sbr.rel (0) target = $region29
  $region28: #{fwd.1} parent=0 // pred_region
    _
  $region29: #{fwd.1} parent=0 // pred_fallthru
    _
  // Predicated region
  $region30: #{fwd.1} parent=0 // pred_check
    _
  $region31: #{fwd.1} parent=0 // pred_check_branch
    %29 = sbr.rel (0) target = $region33
  $region32: #{fwd.1} parent=0 // pred_region
    _
  $region33: #{fwd.1} parent=0 // pred_fallthru
    _
  // Predicated region
  $region34: #{fwd.1} parent=0 // pred_check
    _
  $region35: #{fwd.1} parent=0 // pred_check_branch
    %31 = sbr.rel (0) target = $region37
  $region36: #{fwd.1} parent=0 // pred_region
    _
  $region37: #{fwd.1} parent=0 // pred_fallthru
    _
  %v32 = vld [vmem:[%s0] sm:$0xff]
  %v33 = vld [vmem:[%s0 + $0x8] sm:$0xff]
  %v34 = vld [vmem:[%s0 + $0x10] sm:$0xff]
  %v35 = vld [vmem:[%s0 + $0x18] sm:$0xff]
  %v36 = vld [vmem:[%s0 + $0x20] sm:$0xff]
  %v37 = vld [vmem:[%s0 + $0x28] sm:$0xff]
  %v38 = vld [vmem:[%s0 + $0x30] sm:$0xff]
  %v39 = vld [vmem:[%s0 + $0x38] sm:$0xff]
  %v40 = vld [vmem:[%s1] sm:$0xff]
  %v41 = vld [vmem:[%s1 + $0x8] sm:$0xff]
  %v42 = vld [vmem:[%s1 + $0x10] sm:$0xf]
  %v43 = vld [vmem:[%s2] sm:$0x1]
  %v45 = vlaneseq
  %v46 = vshrl.u32 %v45, 7
  %v47 = vsub.s32 0, %v46
  %v48 = vrot.slane %v43, %v47
  %vm50 = vcmask 162816
  %v52 = vsel %vm50, %v32, 0
  %v55 = vsel %vm50, %v33, 0
  %v58 = vsel %vm50, %v34, 0
  %v61 = vsel %vm50, %v35, 0
  %v64 = vsel %vm50, %v36, 0
  %v67 = vsel %vm50, %v37, 0
  %v70 = vsel %vm50, %v38, 0
  %v73 = vsel %vm50, %v39, 0
  %vm75 = vcmask 1043456
  %v77 = vsel %vm75, %v42, 0
  %79 = vmatprep.subr.mxu0 0.0
  %80 = vmatpush1.msra.mxu0 0.0
  %81 = vmatprep.subr.mxu0 0.0
  %82 = vmatpush1.msra.mxu0 0.0
  %83 = vmatprep.subr.mxu0 0.0
  %84 = vmatpush1.msra.mxu0 0.0
  %85 = vmatprep.subr.mxu0 0.0
  %86 = vmatpush1.msra.mxu0 0.0
  %87 = vmatprep.subr.mxu0 0.0
  %88 = vmatpush1.msra.mxu0 0.0
  %89 = vmatprep.subr.mxu0 0.0
  %90 = vmatpush1.msra.mxu0 0.0
  %91 = vmatprep.subr.mxu0 0.0
  %92 = vmatpush1.msra.mxu0 0.0
  %93 = vmatprep.subr.mxu0 0.0
  %94 = vmatpush1.msra.mxu0 0.0
  %95 = vmatprep.subr.mxu0 0.0
  %96 = vmatpush1.msra.mxu0 0.0
  %97 = vmatprep.subr.mxu0 0.0
  %98 = vmatpush1.msra.mxu0 0.0
  %99 = vmatprep.subr.mxu0 0.0
  %100 = vmatpush1.msra.mxu0 0.0
  %101 = vmatprep.subr.mxu0 0.0
  %102 = vmatpush1.msra.mxu0 0.0
  %103 = vmatprep.subr.mxu0 0.0
  %104 = vmatpush1.msra.mxu0 0.0
  %105 = vmatprep.subr.mxu0 0.0
  %106 = vmatpush1.msra.mxu0 %v77
  %107 = vmatprep.subr.mxu0 0.0
  %108 = vmatpush1.msra.mxu0 %v41
  %109 = vmatprep.subr.mxu0 0.0
  %110 = vmatpush1.msra.mxu0 %v40
  %111 = vmatprep.subr.mxu0 0.0
  %112 = vmatpush2.msra.mxu0 0.0
  %113 = vmatprep.subr.mxu0 0.0
  %114 = vmatpush2.msra.mxu0 0.0
  %115 = vmatprep.subr.mxu0 0.0
  %116 = vmatpush2.msra.mxu0 0.0
  %117 = vmatprep.subr.mxu0 0.0
  %118 = vmatpush2.msra.mxu0 0.0
  %119 = vmatprep.subr.mxu0 0.0
  %120 = vmatpush2.msra.mxu0 0.0
  %121 = vmatprep.subr.mxu0 0.0
  %122 = vmatpush2.msra.mxu0 0.0
  %123 = vmatprep.subr.mxu0 0.0
  %124 = vmatpush2.msra.mxu0 0.0
  %125 = vmatprep.subr.mxu0 0.0
  %126 = vmatpush2.msra.mxu0 0.0
  %127 = vmatprep.subr.mxu0 0.0
  %128 = vmatpush2.msra.mxu0 0.0
  %129 = vmatprep.subr.mxu0 0.0
  %130 = vmatpush2.msra.mxu0 0.0
  %131 = vmatprep.subr.mxu0 0.0
  %132 = vmatpush2.msra.mxu0 0.0
  %133 = vmatprep.subr.mxu0 0.0
  %134 = vmatpush2.msra.mxu0 0.0
  %135 = vmatprep.subr.mxu0 0.0
  %136 = vmatpush2.msra.mxu0 0.0
  %137 = vmatprep.subr.mxu0 0.0
  %138 = vmatpush2.msra.mxu0 0.0
  %139 = vmatprep.subr.mxu0 0.0
  %140 = vmatpush2.msra.mxu0 0.0
  %141 = vmatprep.subr.mxu0 0.0
  %142 = vmatpush2.msra.mxu0 0.0
  %143 = vmatprep.mubr.f32.mxu0 0.0
  %144 = vmatmul.mubr.f32.gmra.mxu0 %v52
  %v145 = vpop.f32.mrf.mxu0
  %v146 = vadd.f32 %v48, %v145
  %v147 = vpop.f32.mrf.mxu0
  %148 = vmatprep.mubr.f32.mxu0 0.0
  %149 = vmatmul.mubr.f32.gmra.mxu0 %v55
  %v150 = vpop.f32.mrf.mxu0
  %v151 = vadd.f32 %v48, %v150
  %v152 = vpop.f32.mrf.mxu0
  %153 = vmatprep.mubr.f32.mxu0 0.0
  %154 = vmatmul.mubr.f32.gmra.mxu0 %v58
  %v155 = vpop.f32.mrf.mxu0
  %v156 = vadd.f32 %v48, %v155
  %v157 = vpop.f32.mrf.mxu0
  %158 = vmatprep.mubr.f32.mxu0 0.0
  %159 = vmatmul.mubr.f32.gmra.mxu0 %v61
  %v160 = vpop.f32.mrf.mxu0
  %v161 = vadd.f32 %v48, %v160
  %v162 = vpop.f32.mrf.mxu0
  %163 = vmatprep.mubr.f32.mxu0 0.0
  %164 = vmatmul.mubr.f32.gmra.mxu0 %v64
  %v165 = vpop.f32.mrf.mxu0
  %v166 = vadd.f32 %v48, %v165
  %v167 = vpop.f32.mrf.mxu0
  %168 = vmatprep.mubr.f32.mxu0 0.0
  %169 = vmatmul.mubr.f32.gmra.mxu0 %v67
  %v170 = vpop.f32.mrf.mxu0
  %v171 = vadd.f32 %v48, %v170
  %v172 = vpop.f32.mrf.mxu0
  %173 = vmatprep.mubr.f32.mxu0 0.0
  %174 = vmatmul.mubr.f32.gmra.mxu0 %v70
  %v175 = vpop.f32.mrf.mxu0
  %v176 = vadd.f32 %v48, %v175
  %v177 = vpop.f32.mrf.mxu0
  %178 = vmatprep.mubr.f32.mxu0 0.0
  %179 = vmatmul.mubr.f32.gmra.mxu0 %v73
  %v180 = vpop.f32.mrf.mxu0
  %v181 = vadd.f32 %v48, %v180
  %v182 = vpop.f32.mrf.mxu0
  %183 = vdwg.mxu0
  %v184 = vmax.f32 %v146, 0.0
  %v185 = vmax.f32 %v151, 0.0
  %v186 = vmax.f32 %v156, 0.0
  %v187 = vmax.f32 %v161, 0.0
  %v188 = vmax.f32 %v166, 0.0
  %v189 = vmax.f32 %v171, 0.0
  %v190 = vmax.f32 %v176, 0.0
  %v191 = vmax.f32 %v181, 0.0
  %v192 = vld [vmem:[%s3] sm:$0xff]
  %v193 = vld [vmem:[%s3 + $0x8] sm:$0xff]
  %v194 = vld [vmem:[%s3 + $0x10] sm:$0xf]
  %v195 = vld [vmem:[%s4] sm:$0x1]
  %v197 = vlaneseq
  %v198 = vshrl.u32 %v197, 7
  %v199 = vsub.s32 0, %v198
  %v200 = vrot.slane %v195, %v199
  %v203 = vsel %vm50, %v184, 0
  %v206 = vsel %vm50, %v185, 0
  %v209 = vsel %vm50, %v186, 0
  %v212 = vsel %vm50, %v187, 0
  %v215 = vsel %vm50, %v188, 0
  %v218 = vsel %vm50, %v189, 0
  %v221 = vsel %vm50, %v190, 0
  %v224 = vsel %vm50, %v191, 0
  %v227 = vsel %vm75, %v194, 0
  %229 = vmatprep.subr.mxu0 0.0
  %230 = vmatpush1.msra.mxu0 0.0
  %231 = vmatprep.subr.mxu0 0.0
  %232 = vmatpush1.msra.mxu0 0.0
  %233 = vmatprep.subr.mxu0 0.0
  %234 = vmatpush1.msra.mxu0 0.0
  %235 = vmatprep.subr.mxu0 0.0
  %236 = vmatpush1.msra.mxu0 0.0
  %237 = vmatprep.subr.mxu0 0.0
  %238 = vmatpush1.msra.mxu0 0.0
  %239 = vmatprep.subr.mxu0 0.0
  %240 = vmatpush1.msra.mxu0 0.0
  %241 = vmatprep.subr.mxu0 0.0
  %242 = vmatpush1.msra.mxu0 0.0
  %243 = vmatprep.subr.mxu0 0.0
  %244 = vmatpush1.msra.mxu0 0.0
  %245 = vmatprep.subr.mxu0 0.0
  %246 = vmatpush1.msra.mxu0 0.0
  %247 = vmatprep.subr.mxu0 0.0
  %248 = vmatpush1.msra.mxu0 0.0
  %249 = vmatprep.subr.mxu0 0.0
  %250 = vmatpush1.msra.mxu0 0.0
  %251 = vmatprep.subr.mxu0 0.0
  %252 = vmatpush1.msra.mxu0 0.0
  %253 = vmatprep.subr.mxu0 0.0
  %254 = vmatpush1.msra.mxu0 0.0
  %255 = vmatprep.subr.mxu0 0.0
  %256 = vmatpush1.msra.mxu0 %v227
  %257 = vmatprep.subr.mxu0 0.0
  %258 = vmatpush1.msra.mxu0 %v193
  %259 = vmatprep.subr.mxu0 0.0
  %260 = vmatpush1.msra.mxu0 %v192
  %261 = vmatprep.subr.mxu0 0.0
  %262 = vmatpush2.msra.mxu0 0.0
  %263 = vmatprep.subr.mxu0 0.0
  %264 = vmatpush2.msra.mxu0 0.0
  %265 = vmatprep.subr.mxu0 0.0
  %266 = vmatpush2.msra.mxu0 0.0
  %267 = vmatprep.subr.mxu0 0.0
  %268 = vmatpush2.msra.mxu0 0.0
  %269 = vmatprep.subr.mxu0 0.0
  %270 = vmatpush2.msra.mxu0 0.0
  %271 = vmatprep.subr.mxu0 0.0
  %272 = vmatpush2.msra.mxu0 0.0
  %273 = vmatprep.subr.mxu0 0.0
  %274 = vmatpush2.msra.mxu0 0.0
  %275 = vmatprep.subr.mxu0 0.0
  %276 = vmatpush2.msra.mxu0 0.0
  %277 = vmatprep.subr.mxu0 0.0
  %278 = vmatpush2.msra.mxu0 0.0
  %279 = vmatprep.subr.mxu0 0.0
  %280 = vmatpush2.msra.mxu0 0.0
  %281 = vmatprep.subr.mxu0 0.0
  %282 = vmatpush2.msra.mxu0 0.0
  %283 = vmatprep.subr.mxu0 0.0
  %284 = vmatpush2.msra.mxu0 0.0
  %285 = vmatprep.subr.mxu0 0.0
  %286 = vmatpush2.msra.mxu0 0.0
  %287 = vmatprep.subr.mxu0 0.0
  %288 = vmatpush2.msra.mxu0 0.0
  %289 = vmatprep.subr.mxu0 0.0
  %290 = vmatpush2.msra.mxu0 0.0
  %291 = vmatprep.subr.mxu0 0.0
  %292 = vmatpush2.msra.mxu0 0.0
  %293 = vmatprep.mubr.f32.mxu0 0.0
  %294 = vmatmul.mubr.f32.gmra.mxu0 %v203
  %v295 = vpop.f32.mrf.mxu0
  %v296 = vadd.f32 %v200, %v295
  %v297 = vpop.f32.mrf.mxu0
  %298 = vmatprep.mubr.f32.mxu0 0.0
  %299 = vmatmul.mubr.f32.gmra.mxu0 %v206
  %v300 = vpop.f32.mrf.mxu0
  %v301 = vadd.f32 %v200, %v300
  %v302 = vpop.f32.mrf.mxu0
  %303 = vmatprep.mubr.f32.mxu0 0.0
  %304 = vmatmul.mubr.f32.gmra.mxu0 %v209
  %v305 = vpop.f32.mrf.mxu0
  %v306 = vadd.f32 %v200, %v305
  %v307 = vpop.f32.mrf.mxu0
  %308 = vmatprep.mubr.f32.mxu0 0.0
  %309 = vmatmul.mubr.f32.gmra.mxu0 %v212
  %v310 = vpop.f32.mrf.mxu0
  %v311 = vadd.f32 %v200, %v310
  %v312 = vpop.f32.mrf.mxu0
  %313 = vmatprep.mubr.f32.mxu0 0.0
  %314 = vmatmul.mubr.f32.gmra.mxu0 %v215
  %v315 = vpop.f32.mrf.mxu0
  %v316 = vadd.f32 %v200, %v315
  %v317 = vpop.f32.mrf.mxu0
  %318 = vmatprep.mubr.f32.mxu0 0.0
  %319 = vmatmul.mubr.f32.gmra.mxu0 %v218
  %v320 = vpop.f32.mrf.mxu0
  %v321 = vadd.f32 %v200, %v320
  %v322 = vpop.f32.mrf.mxu0
  %323 = vmatprep.mubr.f32.mxu0 0.0
  %324 = vmatmul.mubr.f32.gmra.mxu0 %v221
  %v325 = vpop.f32.mrf.mxu0
  %v326 = vadd.f32 %v200, %v325
  %v327 = vpop.f32.mrf.mxu0
  %328 = vmatprep.mubr.f32.mxu0 0.0
  %329 = vmatmul.mubr.f32.gmra.mxu0 %v224
  %v330 = vpop.f32.mrf.mxu0
  %v331 = vadd.f32 %v200, %v330
  %v332 = vpop.f32.mrf.mxu0
  %333 = vdwg.mxu0
  %v334 = vmax.f32 %v296, 0.0
  %v335 = vmax.f32 %v301, 0.0
  %v336 = vmax.f32 %v306, 0.0
  %v337 = vmax.f32 %v311, 0.0
  %v338 = vmax.f32 %v316, 0.0
  %v339 = vmax.f32 %v321, 0.0
  %v340 = vmax.f32 %v326, 0.0
  %v341 = vmax.f32 %v331, 0.0
  %v342 = vld [vmem:[%s5] sm:$0xff]
  %v343 = vld [vmem:[%s5 + $0x8] sm:$0xff]
  %v344 = vld [vmem:[%s5 + $0x10] sm:$0xff]
  %v345 = vld [vmem:[%s5 + $0x18] sm:$0xff]
  %v346 = vld [vmem:[%s5 + $0x20] sm:$0xff]
  %v347 = vld [vmem:[%s6] sm:$0x1]
  %v349 = vlaneseq
  %v350 = vshrl.u32 %v349, 7
  %v351 = vsub.s32 0, %v350
  %v352 = vrot.slane %v347, %v351
  %vm354 = vcmask 326656
  %v356 = vsel %vm354, %v334, 0
  %v359 = vsel %vm354, %v335, 0
  %v362 = vsel %vm354, %v336, 0
  %v365 = vsel %vm354, %v337, 0
  %v368 = vsel %vm354, %v338, 0
  %v371 = vsel %vm354, %v339, 0
  %v374 = vsel %vm354, %v340, 0
  %v377 = vsel %vm354, %v341, 0
  %379 = vmatprep.subr.mxu0 0.0
  %380 = vmatpush1.msra.mxu0 0.0
  %381 = vmatprep.subr.mxu0 0.0
  %382 = vmatpush1.msra.mxu0 0.0
  %383 = vmatprep.subr.mxu0 0.0
  %384 = vmatpush1.msra.mxu0 0.0
  %385 = vmatprep.subr.mxu0 0.0
  %386 = vmatpush1.msra.mxu0 0.0
  %387 = vmatprep.subr.mxu0 0.0
  %388 = vmatpush1.msra.mxu0 0.0
  %389 = vmatprep.subr.mxu0 0.0
  %390 = vmatpush1.msra.mxu0 0.0
  %391 = vmatprep.subr.mxu0 0.0
  %392 = vmatpush1.msra.mxu0 0.0
  %393 = vmatprep.subr.mxu0 0.0
  %394 = vmatpush1.msra.mxu0 0.0
  %395 = vmatprep.subr.mxu0 0.0
  %396 = vmatpush1.msra.mxu0 0.0
  %397 = vmatprep.subr.mxu0 0.0
  %398 = vmatpush1.msra.mxu0 0.0
  %399 = vmatprep.subr.mxu0 0.0
  %400 = vmatpush1.msra.mxu0 0.0
  %401 = vmatprep.subr.mxu0 0.0
  %402 = vmatpush1.msra.mxu0 %v346
  %403 = vmatprep.subr.mxu0 0.0
  %404 = vmatpush1.msra.mxu0 %v345
  %405 = vmatprep.subr.mxu0 0.0
  %406 = vmatpush1.msra.mxu0 %v344
  %407 = vmatprep.subr.mxu0 0.0
  %408 = vmatpush1.msra.mxu0 %v343
  %409 = vmatprep.subr.mxu0 0.0
  %410 = vmatpush1.msra.mxu0 %v342
  %411 = vmatprep.subr.mxu0 0.0
  %412 = vmatpush2.msra.mxu0 0.0
  %413 = vmatprep.subr.mxu0 0.0
  %414 = vmatpush2.msra.mxu0 0.0
  %415 = vmatprep.subr.mxu0 0.0
  %416 = vmatpush2.msra.mxu0 0.0
  %417 = vmatprep.subr.mxu0 0.0
  %418 = vmatpush2.msra.mxu0 0.0
  %419 = vmatprep.subr.mxu0 0.0
  %420 = vmatpush2.msra.mxu0 0.0
  %421 = vmatprep.subr.mxu0 0.0
  %422 = vmatpush2.msra.mxu0 0.0
  %423 = vmatprep.subr.mxu0 0.0
  %424 = vmatpush2.msra.mxu0 0.0
  %425 = vmatprep.subr.mxu0 0.0
  %426 = vmatpush2.msra.mxu0 0.0
  %427 = vmatprep.subr.mxu0 0.0
  %428 = vmatpush2.msra.mxu0 0.0
  %429 = vmatprep.subr.mxu0 0.0
  %430 = vmatpush2.msra.mxu0 0.0
  %431 = vmatprep.subr.mxu0 0.0
  %432 = vmatpush2.msra.mxu0 0.0
  %433 = vmatprep.subr.mxu0 0.0
  %434 = vmatpush2.msra.mxu0 0.0
  %435 = vmatprep.subr.mxu0 0.0
  %436 = vmatpush2.msra.mxu0 0.0
  %437 = vmatprep.subr.mxu0 0.0
  %438 = vmatpush2.msra.mxu0 0.0
  %439 = vmatprep.subr.mxu0 0.0
  %440 = vmatpush2.msra.mxu0 0.0
  %441 = vmatprep.subr.mxu0 0.0
  %442 = vmatpush2.msra.mxu0 0.0
  %443 = vmatprep.mubr.f32.mxu0 0.0
  %444 = vmatmul.mubr.f32.gmra.mxu0 %v356
  %v445 = vpop.f32.mrf.mxu0
  %v446 = vadd.f32 %v352, %v445
  %v447 = vpop.f32.mrf.mxu0
  %448 = vmatprep.mubr.f32.mxu0 0.0
  %449 = vmatmul.mubr.f32.gmra.mxu0 %v359
  %v450 = vpop.f32.mrf.mxu0
  %v451 = vadd.f32 %v352, %v450
  %v452 = vpop.f32.mrf.mxu0
  %453 = vmatprep.mubr.f32.mxu0 0.0
  %454 = vmatmul.mubr.f32.gmra.mxu0 %v362
  %v455 = vpop.f32.mrf.mxu0
  %v456 = vadd.f32 %v352, %v455
  %v457 = vpop.f32.mrf.mxu0
  %458 = vmatprep.mubr.f32.mxu0 0.0
  %459 = vmatmul.mubr.f32.gmra.mxu0 %v365
  %v460 = vpop.f32.mrf.mxu0
  %v461 = vadd.f32 %v352, %v460
  %v462 = vpop.f32.mrf.mxu0
  %463 = vmatprep.mubr.f32.mxu0 0.0
  %464 = vmatmul.mubr.f32.gmra.mxu0 %v368
  %v465 = vpop.f32.mrf.mxu0
  %v466 = vadd.f32 %v352, %v465
  %v467 = vpop.f32.mrf.mxu0
  %468 = vmatprep.mubr.f32.mxu0 0.0
  %469 = vmatmul.mubr.f32.gmra.mxu0 %v371
  %v470 = vpop.f32.mrf.mxu0
  %v471 = vadd.f32 %v352, %v470
  %v472 = vpop.f32.mrf.mxu0
  %473 = vmatprep.mubr.f32.mxu0 0.0
  %474 = vmatmul.mubr.f32.gmra.mxu0 %v374
  %v475 = vpop.f32.mrf.mxu0
  %v476 = vadd.f32 %v352, %v475
  %v477 = vpop.f32.mrf.mxu0
  %478 = vmatprep.mubr.f32.mxu0 0.0
  %479 = vmatmul.mubr.f32.gmra.mxu0 %v377
  %v480 = vpop.f32.mrf.mxu0
  %v481 = vadd.f32 %v352, %v480
  %v482 = vpop.f32.mrf.mxu0
  %483 = vdwg.mxu0
  %v484 = vmax.f32 %v446, 0.0
  %v485 = vmax.f32 %v451, 0.0
  %v486 = vmax.f32 %v456, 0.0
  %v487 = vmax.f32 %v461, 0.0
  %v488 = vmax.f32 %v466, 0.0
  %v489 = vmax.f32 %v471, 0.0
  %v490 = vmax.f32 %v476, 0.0
  %v491 = vmax.f32 %v481, 0.0
  %v492 = vld [vmem:[%s7] sm:$0xff]
  %v493 = vld [vmem:[%s7 + $0x8] sm:$0xff]
  %v494 = vld [vmem:[%s7 + $0x10] sm:$0xff]
  %v495 = vld [vmem:[%s7 + $0x18] sm:$0xff]
  %v496 = vld [vmem:[%s7 + $0x20] sm:$0xff]
  %v497 = vld [vmem:[%s7 + $0x28] sm:$0xff]
  %v498 = vld [vmem:[%s7 + $0x30] sm:$0xff]
  %v499 = vld [vmem:[%s7 + $0x38] sm:$0xff]
  %v500 = vld [vmem:[%s7 + $0x40] sm:$0xff]
  %v501 = vld [vmem:[%s7 + $0x48] sm:$0xff]
  %v502 = vld [vmem:[%s7 + $0x50] sm:$0xff]
  %v503 = vld [vmem:[%s7 + $0x58] sm:$0xff]
  %v504 = vld [vmem:[%s7 + $0x60] sm:$0xf]
  %v505 = vld [vmem:[%s8] sm:$0x1]
  %v507 = vlaneseq
  %v508 = vshrl.u32 %v507, 7
  %v509 = vsub.s32 0, %v508
  %v510 = vrot.slane %v505, %v509
  %vm512 = vcmask 818176
  %v514 = vsel %vm512, %v484, 0
  %v517 = vsel %vm512, %v485, 0
  %v520 = vsel %vm512, %v486, 0
  %v523 = vsel %vm512, %v487, 0
  %v526 = vsel %vm512, %v488, 0
  %v529 = vsel %vm512, %v489, 0
  %v532 = vsel %vm512, %v490, 0
  %v535 = vsel %vm512, %v491, 0
  %v538 = vsel %vm75, %v504, 0
  %540 = vmatprep.subr.mxu0 0.0
  %541 = vmatpush1.msra.mxu0 0.0
  %542 = vmatprep.subr.mxu0 0.0
  %543 = vmatpush1.msra.mxu0 0.0
  %544 = vmatprep.subr.mxu0 0.0
  %545 = vmatpush1.msra.mxu0 0.0
  %546 = vmatprep.subr.mxu0 0.0
  %547 = vmatpush1.msra.mxu0 %v538
  %548 = vmatprep.subr.mxu0 0.0
  %549 = vmatpush1.msra.mxu0 %v503
  %550 = vmatprep.subr.mxu0 0.0
  %551 = vmatpush1.msra.mxu0 %v502
  %552 = vmatprep.subr.mxu0 0.0
  %553 = vmatpush1.msra.mxu0 %v501
  %554 = vmatprep.subr.mxu0 0.0
  %555 = vmatpush1.msra.mxu0 %v500
  %556 = vmatprep.subr.mxu0 0.0
  %557 = vmatpush1.msra.mxu0 %v499
  %558 = vmatprep.subr.mxu0 0.0
  %559 = vmatpush1.msra.mxu0 %v498
  %560 = vmatprep.subr.mxu0 0.0
  %561 = vmatpush1.msra.mxu0 %v497
  %562 = vmatprep.subr.mxu0 0.0
  %563 = vmatpush1.msra.mxu0 %v496
  %564 = vmatprep.subr.mxu0 0.0
  %565 = vmatpush1.msra.mxu0 %v495
  %566 = vmatprep.subr.mxu0 0.0
  %567 = vmatpush1.msra.mxu0 %v494
  %568 = vmatprep.subr.mxu0 0.0
  %569 = vmatpush1.msra.mxu0 %v493
  %570 = vmatprep.subr.mxu0 0.0
  %571 = vmatpush1.msra.mxu0 %v492
  %572 = vmatprep.subr.mxu0 0.0
  %573 = vmatpush2.msra.mxu0 0.0
  %574 = vmatprep.subr.mxu0 0.0
  %575 = vmatpush2.msra.mxu0 0.0
  %576 = vmatprep.subr.mxu0 0.0
  %577 = vmatpush2.msra.mxu0 0.0
  %578 = vmatprep.subr.mxu0 0.0
  %579 = vmatpush2.msra.mxu0 0.0
  %580 = vmatprep.subr.mxu0 0.0
  %581 = vmatpush2.msra.mxu0 0.0
  %582 = vmatprep.subr.mxu0 0.0
  %583 = vmatpush2.msra.mxu0 0.0
  %584 = vmatprep.subr.mxu0 0.0
  %585 = vmatpush2.msra.mxu0 0.0
  %586 = vmatprep.subr.mxu0 0.0
  %587 = vmatpush2.msra.mxu0 0.0
  %588 = vmatprep.subr.mxu0 0.0
  %589 = vmatpush2.msra.mxu0 0.0
  %590 = vmatprep.subr.mxu0 0.0
  %591 = vmatpush2.msra.mxu0 0.0
  %592 = vmatprep.subr.mxu0 0.0
  %593 = vmatpush2.msra.mxu0 0.0
  %594 = vmatprep.subr.mxu0 0.0
  %595 = vmatpush2.msra.mxu0 0.0
  %596 = vmatprep.subr.mxu0 0.0
  %597 = vmatpush2.msra.mxu0 0.0
  %598 = vmatprep.subr.mxu0 0.0
  %599 = vmatpush2.msra.mxu0 0.0
  %600 = vmatprep.subr.mxu0 0.0
  %601 = vmatpush2.msra.mxu0 0.0
  %602 = vmatprep.subr.mxu0 0.0
  %603 = vmatpush2.msra.mxu0 0.0
  %604 = vmatprep.mubr.f32.mxu0 0.0
  %605 = vmatmul.mubr.f32.gmra.mxu0 %v514
  %v606 = vpop.f32.mrf.mxu0
  %v607 = vadd.f32 %v510, %v606
  %v608 = vpop.f32.mrf.mxu0
  %609 = vmatprep.mubr.f32.mxu0 0.0
  %610 = vmatmul.mubr.f32.gmra.mxu0 %v517
  %v611 = vpop.f32.mrf.mxu0
  %v612 = vadd.f32 %v510, %v611
  %v613 = vpop.f32.mrf.mxu0
  %614 = vmatprep.mubr.f32.mxu0 0.0
  %615 = vmatmul.mubr.f32.gmra.mxu0 %v520
  %v616 = vpop.f32.mrf.mxu0
  %v617 = vadd.f32 %v510, %v616
  %v618 = vpop.f32.mrf.mxu0
  %619 = vmatprep.mubr.f32.mxu0 0.0
  %620 = vmatmul.mubr.f32.gmra.mxu0 %v523
  %v621 = vpop.f32.mrf.mxu0
  %v622 = vadd.f32 %v510, %v621
  %v623 = vpop.f32.mrf.mxu0
  %624 = vmatprep.mubr.f32.mxu0 0.0
  %625 = vmatmul.mubr.f32.gmra.mxu0 %v526
  %v626 = vpop.f32.mrf.mxu0
  %v627 = vadd.f32 %v510, %v626
  %v628 = vpop.f32.mrf.mxu0
  %629 = vmatprep.mubr.f32.mxu0 0.0
  %630 = vmatmul.mubr.f32.gmra.mxu0 %v529
  %v631 = vpop.f32.mrf.mxu0
  %v632 = vadd.f32 %v510, %v631
  %v633 = vpop.f32.mrf.mxu0
  %634 = vmatprep.mubr.f32.mxu0 0.0
  %635 = vmatmul.mubr.f32.gmra.mxu0 %v532
  %v636 = vpop.f32.mrf.mxu0
  %v637 = vadd.f32 %v510, %v636
  %v638 = vpop.f32.mrf.mxu0
  %639 = vmatprep.mubr.f32.mxu0 0.0
  %640 = vmatmul.mubr.f32.gmra.mxu0 %v535
  %v641 = vpop.f32.mrf.mxu0
  %v642 = vadd.f32 %v510, %v641
  %v643 = vpop.f32.mrf.mxu0
  %644 = vdwg.mxu0
  %645 = vst [vmem:[%s9] sm:$0xff] %v607
  %646 = vst [vmem:[%s9 + $0x8] sm:$0xff] %v612
  %647 = vst [vmem:[%s9 + $0x10] sm:$0xff] %v617
  %648 = vst [vmem:[%s9 + $0x18] sm:$0xff] %v622
  %649 = vst [vmem:[%s9 + $0x20] sm:$0xff] %v627
  %650 = vst [vmem:[%s9 + $0x28] sm:$0xff] %v632
  %651 = vst [vmem:[%s9 + $0x30] sm:$0xff] %v637
  %652 = vst [vmem:[%s9 + $0x38] sm:$0xff] %v642
  // Predicated region
  $region38: #{fwd.1} parent=0 // pred_check
    _
  $region39: #{fwd.1} parent=0 // pred_check_branch
    %654 = sbr.rel (0) target = $region41
  $region40: #{fwd.1} parent=0 // pred_region
    _
  $region41: #{fwd.1} parent=0 // pred_fallthru
    _
  // Predicated region
  $region42: #{fwd.1} parent=0 // pred_check
    _
  $region43: #{fwd.1} parent=0 // pred_check_branch
    %656 = sbr.rel (0) target = $region45
  $region44: #{fwd.1} parent=0 // pred_region
    _
  $region45: #{fwd.1} parent=0 // pred_fallthru
    _

</llo_original>
